<compile_context>
chip_gen: v6e
topology: v6e:2x2x1
jax: 0.10.0
libtpu: 0.0.40
codegen_flags: <defaults>
</compile_context>

<pallas_src>
import math

import jax
import jax.numpy as jnp
from jax.experimental import pallas as pl
from jax.experimental.pallas import tpu as pltpu


def _patchmix_kernel(x_ref, w_ref, b_ref, o_ref):
    """One (batch, patch-tile) grid step.

    x_ref: (n_channel, tp, h_dim)     native-layout activations for this tile
    w_ref: (n_channel, h_dim, o_pad)  full per-channel weight (VMEM resident)
    b_ref: (1, o_pad)                 bias (zero-padded)
    o_ref: (tp, o_pad)                output tile
    """
    n_channel = x_ref.shape[0]

    # Bias folded into the accumulator init.
    acc = jnp.broadcast_to(b_ref[...].astype(jnp.float32), o_ref.shape)

    # Unrolled channel contraction: SiLU per channel (keeps the live value at
    # one (tp, h_dim) chunk) then MXU matmul accumulated in f32.
    for c in range(n_channel):
        xc = x_ref[c]
        xc = xc * jax.nn.sigmoid(xc)  # SiLU (elementwise -> commutes with permute)
        acc = acc + jnp.dot(xc, w_ref[c], preferred_element_type=jnp.float32)

    o_ref[...] = acc.astype(o_ref.dtype)


def patchmix_channel_head(
    x,
    weight,
    bias,
    *,
    target_block_bytes=2 << 20,   # ~2 MiB of x per grid step
    vmem_budget_bytes=24 << 20,   # pipelined footprint cap (fits v5e/v6e/v7x)
):
    """x: [B, n_channel, patch_num, h_dim] -> [B, patch_num, out_dim]."""
    B, n_channel, patch_num, h_dim = x.shape
    out_dim, K = weight.shape
    assert K == n_channel * h_dim

    # ---- weights: per-channel view + lane-dense (multiple-of-128) padding ----
    # w3[c, h, o] == weight[o, c*h_dim + h]  (matches torch's channel-major flatten)
    o_pad = max(128, ((out_dim + 127) // 128) * 128)
    w3 = weight.T.reshape(n_channel, h_dim, out_dim)
    b2 = bias.reshape(1, out_dim)
    if o_pad != out_dim:
        w3 = jnp.pad(w3, ((0, 0), (0, 0), (0, o_pad - out_dim)))
        b2 = jnp.pad(b2, ((0, 0), (0, o_pad - out_dim)))
    # (w3/b2 construction is tiny; under jit with static weights XLA hoists/CSEs it.)

    itemsize = x.dtype.itemsize

    # ---- patch-tile selection -------------------------------------------------
    row_bytes = n_channel * h_dim * itemsize  # x bytes per patch row (all channels)
    tp = (target_block_bytes // row_bytes) // 8 * 8
    tp = int(max(8, min(tp, ((patch_num + 7) // 8) * 8)))

    def _footprint(t):
        xb = n_channel * t * h_dim * itemsize       # x block
        ob = t * o_pad * itemsize                   # out block
        ab = t * o_pad * 4                          # f32 accumulator temp
        wb = w3.size * w3.dtype.itemsize            # resident weight
        return 2 * xb + 2 * ob + ab + wb + o_pad * 4

    while tp > 8 and _footprint(tp) > vmem_budget_bytes:
        tp = max(8, (tp // 2) // 8 * 8)
    # TODO(synk): if n_channel*h_dim is so large that even tp=8 overflows VMEM,
    # reintroduce a channel-blocked reduction grid axis.

    if tp >= patch_num:
        tp = patch_num
        # Megacore (v7x has 2 TensorCores sharded over "parallel" axes): when
        # B == 1, split the patch axis so at least two parallel tiles exist.
        if B == 1 and patch_num >= 16:
            tp = max(8, ((patch_num + 1) // 2 + 7) // 8 * 8)
            if tp >= patch_num:
                tp = max(8, (patch_num // 2) // 8 * 8)

    grid = (B, pl.cdiv(patch_num, tp))
    vmem_limit = int(min(48 << 20, max(2 * _footprint(tp), 16 << 20)))

    # ---- cost estimate (advisory) ----------------------------------------------
    M = B * patch_num
    cost = pl.CostEstimate(
        flops=2 * M * K * o_pad,
        transcendentals=M * K,  # sigmoid inside SiLU
        bytes_accessed=(
            x.size * itemsize
            + w3.size * w3.dtype.itemsize
            + b2.size * b2.dtype.itemsize
            + M * o_pad * itemsize
        ),
    )

    out = pl.pallas_call(
        _patchmix_kernel,
        out_shape=jax.ShapeDtypeStruct((B, patch_num, o_pad), x.dtype),
        grid_spec=pltpu.PrefetchScalarGridSpec(
            num_scalar_prefetch=0,
            grid=grid,
            in_specs=[
                # x in native [B, C, P, H] layout; permute(0,2,1,3)+flatten is
                # expressed by this index_map + the per-channel weight reshape.
                pl.BlockSpec(
                    (None, n_channel, tp, h_dim), lambda b, p: (b, 0, p, 0)
                ),
                # Full weight, constant index_map -> DMA'd once, VMEM-resident.
                pl.BlockSpec(
                    (n_channel, h_dim, o_pad), lambda b, p: (0, 0, 0)
                ),
                pl.BlockSpec((1, o_pad), lambda b, p: (0, 0)),
            ],
            out_specs=pl.BlockSpec((None, tp, o_pad), lambda b, p: (b, p, 0)),
        ),
        compiler_params=pltpu.CompilerParams(
            dimension_semantics=("parallel", "parallel"),
            vmem_limit_bytes=vmem_limit,
        ),
        cost_estimate=cost,
    )(x, w3, b2)

    if o_pad != out_dim:
        out = out[..., :out_dim]
    return out


def _reference(x, weight, bias):
    x = x * jax.nn.sigmoid(x)
    x = jnp.transpose(x, (0, 2, 1, 3))
    B, P, C, H = x.shape
    x = x.reshape(B, P, C * H)
    return x @ weight.T + bias


if __name__ == "__main__":
    # Small shapes consistent with the module.
    B, n_channel, patch_num, h_dim = 2, 4, 16, 32
    out_dim = 16
    K = n_channel * h_dim

    key = jax.random.PRNGKey(0)
    kx, kw, kb = jax.random.split(key, 3)

    x = jax.random.normal(kx, (B, n_channel, patch_num, h_dim), dtype=jnp.float32)

    # Deterministic init mimicking nn.Linear defaults.
    bound = 1.0 / math.sqrt(K)
    weight = jax.random.uniform(
        kw, (out_dim, K), minval=-bound, maxval=bound, dtype=jnp.float32
    )
    bias = jax.random.uniform(
        kb, (out_dim,), minval=-bound, maxval=bound, dtype=jnp.float32
    )

    y = patchmix_channel_head(x, weight, bias)
    y = jax.block_until_ready(y)

    y_ref = _reference(x, weight, bias)
    assert y.shape == (B, patch_num, out_dim)
    assert jnp.allclose(y, y_ref, atol=1e-5, rtol=1e-5)

    print("KERNEL_OK")
</pallas_src>

<mosaic_0001>
module attributes {stable_mosaic.version = 11 : i64} {
  func.func @_patchmix_kernel(%arg0: i32, %arg1: i32, %arg2: memref<1x4x16x32xf32, #tpu.memory_space<vmem>>, %arg3: memref<4x32x128xf32, #tpu.memory_space<vmem>>, %arg4: memref<1x128xf32, #tpu.memory_space<vmem>>, %arg5: memref<1x16x128xf32, #tpu.memory_space<vmem>>) attributes {dimension_semantics = [#tpu.dimension_semantics<parallel>, #tpu.dimension_semantics<parallel>], iteration_bounds = array<i64: 2, 1>, scalar_prefetch = 0 : i64, scratch_operands = 0 : i64, tpu.core_type = #tpu.core_type<tc>, window_params = [{transform_indices = @transform_0, window_bounds = array<i64: 1, 4, 16, 32>}, {pipeline_mode = #tpu.pipeline_mode<synchronous>, transform_indices = @transform_1, window_bounds = array<i64: 4, 32, 128>}, {pipeline_mode = #tpu.pipeline_mode<synchronous>, transform_indices = @transform_2, window_bounds = array<i64: 1, 128>}, {transform_indices = @transform_3, window_bounds = array<i64: 1, 16, 128>}]} {
    %c0 = arith.constant 0 : index
    %c0_0 = arith.constant 0 : index
    %0 = vector.load %arg4[%c0, %c0_0] : memref<1x128xf32, #tpu.memory_space<vmem>>, vector<1x128xf32>
    %1 = vector.shape_cast %0 : vector<1x128xf32> to vector<1x128xf32>
    %2 = vector.broadcast %1 : vector<1x128xf32> to vector<16x128xf32>
    %c0_1 = arith.constant 0 : index
    %c0_2 = arith.constant 0 : index
    %c0_3 = arith.constant 0 : index
    %c0_4 = arith.constant 0 : index
    %3 = vector.load %arg2[%c0_1, %c0_2, %c0_3, %c0_4] : memref<1x4x16x32xf32, #tpu.memory_space<vmem>>, vector<1x1x16x32xf32>
    %4 = vector.shape_cast %3 : vector<1x1x16x32xf32> to vector<16x32xf32>
    %5 = arith.negf %4 : vector<16x32xf32>
    %6 = math.exp %5 : vector<16x32xf32>
    %cst = arith.constant 1.000000e+00 : f32
    %7 = vector.broadcast %cst : f32 to vector<16x32xf32>
    %8 = arith.addf %7, %6 : vector<16x32xf32>
    %9 = arith.divf %7, %8 : vector<16x32xf32>
    %10 = arith.mulf %4, %9 : vector<16x32xf32>
    %c0_5 = arith.constant 0 : index
    %c0_6 = arith.constant 0 : index
    %c0_7 = arith.constant 0 : index
    %11 = vector.load %arg3[%c0_5, %c0_6, %c0_7] : memref<4x32x128xf32, #tpu.memory_space<vmem>>, vector<1x32x128xf32>
    %12 = vector.shape_cast %11 : vector<1x32x128xf32> to vector<32x128xf32>
    %cst_8 = arith.constant dense<0.000000e+00> : vector<16x128xf32>
    %13 = tpu.matmul %10, %12, %cst_8 {dimension_numbers = #tpu.dot_dimension_numbers<[1], [0], [0], [1], [0, 0, 1, 1], [], []>} : vector<16x32xf32>, vector<32x128xf32>, vector<16x128xf32> -> vector<16x128xf32>
    %14 = arith.addf %2, %13 : vector<16x128xf32>
    %c0_9 = arith.constant 0 : index
    %c1 = arith.constant 1 : index
    %c0_10 = arith.constant 0 : index
    %c0_11 = arith.constant 0 : index
    %15 = vector.load %arg2[%c0_9, %c1, %c0_10, %c0_11] : memref<1x4x16x32xf32, #tpu.memory_space<vmem>>, vector<1x1x16x32xf32>
    %16 = vector.shape_cast %15 : vector<1x1x16x32xf32> to vector<16x32xf32>
    %17 = arith.negf %16 : vector<16x32xf32>
    %18 = math.exp %17 : vector<16x32xf32>
    %cst_12 = arith.constant 1.000000e+00 : f32
    %19 = vector.broadcast %cst_12 : f32 to vector<16x32xf32>
    %20 = arith.addf %19, %18 : vector<16x32xf32>
    %21 = arith.divf %19, %20 : vector<16x32xf32>
    %22 = arith.mulf %16, %21 : vector<16x32xf32>
    %c1_13 = arith.constant 1 : index
    %c0_14 = arith.constant 0 : index
    %c0_15 = arith.constant 0 : index
    %23 = vector.load %arg3[%c1_13, %c0_14, %c0_15] : memref<4x32x128xf32, #tpu.memory_space<vmem>>, vector<1x32x128xf32>
    %24 = vector.shape_cast %23 : vector<1x32x128xf32> to vector<32x128xf32>
    %cst_16 = arith.constant dense<0.000000e+00> : vector<16x128xf32>
    %25 = tpu.matmul %22, %24, %cst_16 {dimension_numbers = #tpu.dot_dimension_numbers<[1], [0], [0], [1], [0, 0, 1, 1], [], []>} : vector<16x32xf32>, vector<32x128xf32>, vector<16x128xf32> -> vector<16x128xf32>
    %26 = arith.addf %14, %25 : vector<16x128xf32>
    %c0_17 = arith.constant 0 : index
    %c2 = arith.constant 2 : index
    %c0_18 = arith.constant 0 : index
    %c0_19 = arith.constant 0 : index
    %27 = vector.load %arg2[%c0_17, %c2, %c0_18, %c0_19] : memref<1x4x16x32xf32, #tpu.memory_space<vmem>>, vector<1x1x16x32xf32>
    %28 = vector.shape_cast %27 : vector<1x1x16x32xf32> to vector<16x32xf32>
    %29 = arith.negf %28 : vector<16x32xf32>
    %30 = math.exp %29 : vector<16x32xf32>
    %cst_20 = arith.constant 1.000000e+00 : f32
    %31 = vector.broadcast %cst_20 : f32 to vector<16x32xf32>
    %32 = arith.addf %31, %30 : vector<16x32xf32>
    %33 = arith.divf %31, %32 : vector<16x32xf32>
    %34 = arith.mulf %28, %33 : vector<16x32xf32>
    %c2_21 = arith.constant 2 : index
    %c0_22 = arith.constant 0 : index
    %c0_23 = arith.constant 0 : index
    %35 = vector.load %arg3[%c2_21, %c0_22, %c0_23] : memref<4x32x128xf32, #tpu.memory_space<vmem>>, vector<1x32x128xf32>
    %36 = vector.shape_cast %35 : vector<1x32x128xf32> to vector<32x128xf32>
    %cst_24 = arith.constant dense<0.000000e+00> : vector<16x128xf32>
    %37 = tpu.matmul %34, %36, %cst_24 {dimension_numbers = #tpu.dot_dimension_numbers<[1], [0], [0], [1], [0, 0, 1, 1], [], []>} : vector<16x32xf32>, vector<32x128xf32>, vector<16x128xf32> -> vector<16x128xf32>
    %38 = arith.addf %26, %37 : vector<16x128xf32>
    %c0_25 = arith.constant 0 : index
    %c3 = arith.constant 3 : index
    %c0_26 = arith.constant 0 : index
    %c0_27 = arith.constant 0 : index
    %39 = vector.load %arg2[%c0_25, %c3, %c0_26, %c0_27] : memref<1x4x16x32xf32, #tpu.memory_space<vmem>>, vector<1x1x16x32xf32>
    %40 = vector.shape_cast %39 : vector<1x1x16x32xf32> to vector<16x32xf32>
    %41 = arith.negf %40 : vector<16x32xf32>
    %42 = math.exp %41 : vector<16x32xf32>
    %cst_28 = arith.constant 1.000000e+00 : f32
    %43 = vector.broadcast %cst_28 : f32 to vector<16x32xf32>
    %44 = arith.addf %43, %42 : vector<16x32xf32>
    %45 = arith.divf %43, %44 : vector<16x32xf32>
    %46 = arith.mulf %40, %45 : vector<16x32xf32>
    %c3_29 = arith.constant 3 : index
    %c0_30 = arith.constant 0 : index
    %c0_31 = arith.constant 0 : index
    %47 = vector.load %arg3[%c3_29, %c0_30, %c0_31] : memref<4x32x128xf32, #tpu.memory_space<vmem>>, vector<1x32x128xf32>
    %48 = vector.shape_cast %47 : vector<1x32x128xf32> to vector<32x128xf32>
    %cst_32 = arith.constant dense<0.000000e+00> : vector<16x128xf32>
    %49 = tpu.matmul %46, %48, %cst_32 {dimension_numbers = #tpu.dot_dimension_numbers<[1], [0], [0], [1], [0, 0, 1, 1], [], []>} : vector<16x32xf32>, vector<32x128xf32>, vector<16x128xf32> -> vector<16x128xf32>
    %50 = arith.addf %38, %49 : vector<16x128xf32>
    %c0_33 = arith.constant 0 : index
    %c0_34 = arith.constant 0 : index
    %c0_35 = arith.constant 0 : index
    %51 = vector.load %arg5[%c0_33, %c0_34, %c0_35] : memref<1x16x128xf32, #tpu.memory_space<vmem>>, vector<1x16x128xf32>
    %52 = vector.shape_cast %51 : vector<1x16x128xf32> to vector<16x128xf32>
    %53 = vector.shape_cast %50 : vector<16x128xf32> to vector<1x16x128xf32>
    tpu.vector_store %arg5[%c0_33, %c0_34, %c0_35], %53 {strides = array<i32>} : memref<1x16x128xf32, #tpu.memory_space<vmem>>, vector<1x16x128xf32>,
    return
  }
  func.func @transform_0(%arg0: i32, %arg1: i32) -> (i32, i32, i32, i32) {
    %c0_i32 = arith.constant 0 : i32
    %c0_i32_0 = arith.constant 0 : i32
    %c0_i32_1 = arith.constant 0 : i32
    return %arg0, %c0_i32, %arg1, %c0_i32_0 : i32, i32, i32, i32
  }
  func.func @transform_1(%arg0: i32, %arg1: i32) -> (i32, i32, i32) {
    %c0_i32 = arith.constant 0 : i32
    %c0_i32_0 = arith.constant 0 : i32
    %c0_i32_1 = arith.constant 0 : i32
    %c0_i32_2 = arith.constant 0 : i32
    return %c0_i32, %c0_i32_0, %c0_i32_1 : i32, i32, i32
  }
  func.func @transform_2(%arg0: i32, %arg1: i32) -> (i32, i32) {
    %c0_i32 = arith.constant 0 : i32
    %c0_i32_0 = arith.constant 0 : i32
    %c0_i32_1 = arith.constant 0 : i32
    return %c0_i32, %c0_i32_0 : i32, i32
  }
  func.func @transform_3(%arg0: i32, %arg1: i32) -> (i32, i32, i32) {
    %c0_i32 = arith.constant 0 : i32
    %c0_i32_0 = arith.constant 0 : i32
    return %arg0, %arg1, %c0_i32 : i32, i32, i32
  }
}

</mosaic_0001>

<llo_original>
// kernel: tpu_custom_call.1
$region0: #{tpu_custom_call.1}
  #allocation0 [shape = 'u32[]', space=smem, size = 0x4, offset = 0x4, fixed_abs, tag = 'smem constant byte address 0x4 - core index']
  #allocation1 [shape = 'u32[144,128]{1,0:T(1,128)}', space=vmem, size = 0x12000, scoped, tag = 'internal scratch']
  %s0 = inlined_call_operand.hbm [shape: f32[2,4,16,32], index: 0, kind: input, shape index: {}]
  %s1 = inlined_call_operand.hbm [shape: f32[4,32,128], index: 1, kind: input, shape index: {}]
  %s2 = inlined_call_operand.vmem [shape: f32[1,128], index: 2, kind: input, shape index: {}]
  %s3 = inlined_call_operand.hbm [shape: f32[2,16,128], index: 3, kind: output, shape index: {}]
  %s4 = sld [smem:[#allocation0]]
  $region53: #{tpu_custom_call.1} parent=0
    _
  %s6 = ssub.s32 1, %s4
  %s7 = scalar_select 0, %s6, %s4
  $region1: #{tpu_custom_call.1} parent=0
    #allocation2 [shape = 'u8[65536]{0}', space=vmem, size = 0x10000, scoped, tag = 'input window, operand 0']
    #allocation3 [shape = 's32[2]{0}', space=sflag, size = 0x8, scoped, tag = 'scoped memory for tpu_custom_call.1']
    #allocation4 [shape = 's32[2]{0}', space=sflag, size = 0x8, scoped, tag = 'scoped memory for tpu_custom_call.1']
    #allocation5 [shape = 'u8[65536]{0}', space=vmem, size = 0x10000, scoped, tag = 'input window, operand 1, single buffered']
    #allocation6 [shape = 's32[1]{0}', space=sflag, size = 0x4, scoped, tag = 'scoped memory for tpu_custom_call.1']
    #allocation7 [shape = 'u8[16384]{0}', space=vmem, size = 0x4000, scoped, tag = 'output window, operand 0']
    %8 = vsyncpa [#allocation3], 0
    %s9 = scalar_lea.sflag [#allocation3], 1
    %10 = vsyncpa %s9, 0
    %11 = vsyncpa [#allocation6], 0
    %12 = vsyncpa [#allocation4], 0
    %s13 = scalar_lea.sflag [#allocation4], 1
    %14 = vsyncpa %s13, 0
    loop: start=0, step=1, limit=4
    $region2: #{tpu_custom_call.1} parent=1 // loop_pre_header
      _
    $region3: #{tpu_custom_call.1} parent=1 // loop_header
      %s16 = sphi 0, %s20
      %p17 = scmp.ge.s32.totalorder %s16, 4
      %s23 = sphi 0, %s35
      %s24 = sphi 0, %s31
      %s25 = sphi 0, %s23
      %s26 = sphi 0, %s24
      %s27 = sphi 0, %s25
      %s28 = sphi 0, %s26
      %s40 = sphi 0, %s42
      %s43 = sphi 0, %s40
      %s44 = sphi 0, %s43
      %s60 = sphi 0, %s44
      %s64 = sphi 0, %s64
      %s66 = sphi 0, %s64
      %s67 = sphi 0, %s66
      %s81 = sphi 0, %s67
      %s85 = sphi 0, %s85
      %s87 = sphi 0, %s85
      %s88 = sphi 0, %s87
      %s102 = sphi 0, %s88
      %s110 = sphi 0, %s112
      %s113 = sphi 0, %s110
      %s114 = sphi 0, %s113
      %s130 = sphi 0, %s114
    $region4: #{tpu_custom_call.1} parent=1 // loop_header_branch
      %19 = sbr.rel (%p17) target = $region8
    $region5: #{tpu_custom_call.1} parent=1 // loop_body
      %s21 = ssub.s32 %s16, 1
      %s22 = ssub.s32 %s16, 2
      %s29 = sadd.s32 1, %s24
      %p30 = scmp.ge.s32.totalorder %s29, 1
      %s31 = scalar_select %p30, 0, %s29
      %s32 = sadd.s32 1, %s23
      %s33 = scalar_select %p30, %s32, %s23
      %p34 = scmp.ge.s32.totalorder %s33, 2
      %s35 = scalar_select %p34, 0, %s33
      %s36 = ssub.s32 %s23, %s35
      %s37 = ssub.s32 %s24, %s31
      %s38 = sor.u32 %s36, %s37
      %p39 = scmp.eq.s32.totalorder %s38, 0
      %s41 = sadd.s32 %s40, 1
      %s42 = scalar_select %p39, %s40, %s41
      %p45 = pneg %p39
      %p46 = scmp.eq.s32.totalorder %s16, 1
      %p47 = por %p45, %p46
      %p48 = scmp.ne.s32.totalorder %s40, %s43
      %p49 = scmp.eq.s32.totalorder %s16, 0
      %p50 = por %p48, %p49
      %p51 = scmp.ne.s32.totalorder %s40, %s43
      %p52 = scmp.eq.s32.totalorder %s21, 1
      %p53 = por %p51, %p52
      %p54 = scmp.ne.s32.totalorder %s43, %s44
      %p55 = scmp.eq.s32.totalorder %s21, 0
      %p56 = por %p54, %p55
      %p57 = scmp.ne.s32.totalorder %s43, %s44
      %p58 = scmp.eq.s32.totalorder %s22, 1
      %p59 = por %p57, %p58
      %p61 = scmp.ne.s32.totalorder %s44, %s60
      %p62 = scmp.eq.s32.totalorder %s22, 0
      %p63 = por %p61, %p62
      %s65 = sadd.s32 %s64, 1
      %p68 = scmp.eq.s32.totalorder %s16, 1
      %p69 = scmp.ne.s32.totalorder %s64, %s66
      %p70 = scmp.eq.s32.totalorder %s16, 0
      %p71 = por %p69, %p70
      %p72 = scmp.ne.s32.totalorder %s64, %s66
      %p73 = scmp.eq.s32.totalorder %s21, 1
      %p74 = por %p72, %p73
      %p75 = scmp.ne.s32.totalorder %s66, %s67
      %p76 = scmp.eq.s32.totalorder %s21, 0
      %p77 = por %p75, %p76
      %p78 = scmp.ne.s32.totalorder %s66, %s67
      %p79 = scmp.eq.s32.totalorder %s22, 1
      %p80 = por %p78, %p79
      %p82 = scmp.ne.s32.totalorder %s67, %s81
      %p83 = scmp.eq.s32.totalorder %s22, 0
      %p84 = por %p82, %p83
      %s86 = sadd.s32 %s85, 1
      %p89 = scmp.eq.s32.totalorder %s16, 1
      %p90 = scmp.ne.s32.totalorder %s85, %s87
      %p91 = scmp.eq.s32.totalorder %s16, 0
      %p92 = por %p90, %p91
      %p93 = scmp.ne.s32.totalorder %s85, %s87
      %p94 = scmp.eq.s32.totalorder %s21, 1
      %p95 = por %p93, %p94
      %p96 = scmp.ne.s32.totalorder %s87, %s88
      %p97 = scmp.eq.s32.totalorder %s21, 0
      %p98 = por %p96, %p97
      %p99 = scmp.ne.s32.totalorder %s87, %s88
      %p100 = scmp.eq.s32.totalorder %s22, 1
      %p101 = por %p99, %p100
      %p103 = scmp.ne.s32.totalorder %s88, %s102
      %p104 = scmp.eq.s32.totalorder %s22, 0
      %p105 = por %p103, %p104
      %s106 = ssub.s32 %s23, %s35
      %s107 = ssub.s32 %s24, %s31
      %s108 = sor.u32 %s106, %s107
      %p109 = scmp.eq.s32.totalorder %s108, 0
      %s111 = sadd.s32 %s110, 1
      %s112 = scalar_select %p109, %s110, %s111
      %p115 = pneg %p109
      %p116 = scmp.eq.s32.totalorder %s16, 1
      %p117 = por %p115, %p116
      %p118 = scmp.ne.s32.totalorder %s110, %s113
      %p119 = scmp.eq.s32.totalorder %s16, 0
      %p120 = por %p118, %p119
      %p121 = scmp.ne.s32.totalorder %s110, %s113
      %p122 = scmp.eq.s32.totalorder %s21, 1
      %p123 = por %p121, %p122
      %p124 = scmp.ne.s32.totalorder %s113, %s114
      %p125 = scmp.eq.s32.totalorder %s21, 0
      %p126 = por %p124, %p125
      %p127 = scmp.ne.s32.totalorder %s113, %s114
      %p128 = scmp.eq.s32.totalorder %s22, 1
      %p129 = por %p127, %p128
      %p131 = scmp.ne.s32.totalorder %s114, %s130
      %p132 = scmp.eq.s32.totalorder %s22, 0
      %p133 = por %p131, %p132
      %p134 = scmp.le.s32.totalorder 1, %s16
      %p135 = scmp.lt.s32.totalorder %s16, 3
      %p136 = pnand %p134, %p135
      %p137 = pneg %p136
      // Predicated region
      $region9: #{tpu_custom_call.1} parent=5 // pred_check
        _
      $region10: #{tpu_custom_call.1} parent=5 // pred_check_branch
        %139 = sbr.rel (%p136) target = $region12
      $region11: #{tpu_custom_call.1} parent=5 // pred_region
        %s140 = ssub.s32 %s16, 1
        // Predicated region
        $region13: #{tpu_custom_call.1} parent=11 // pred_check
          %p141 = pneg %p77
        $region14: #{tpu_custom_call.1} parent=11 // pred_check_branch
          %143 = sbr.rel (%p141) target = $region16
        $region15: #{tpu_custom_call.1} parent=11 // pred_region
          %s145 = ssub.s32 2048, 2048
          %146 = vsyncadd [#allocation6], %s145
          %s147 = sshll.u32 [#allocation5], 4
          %s148 = int_to_ptr.vmem [resolvable:$true] %s147
          %153 = dma.hbm_to_vmem [thread:$0]  %s1, 2048, %s148, [#allocation6], 128, 128, 8
        $region16: #{tpu_custom_call.1} parent=11 // pred_fallthru
          _
        // Predicated region
        $region17: #{tpu_custom_call.1} parent=11 // pred_check
          %p154 = pneg %p98
        $region18: #{tpu_custom_call.1} parent=11 // pred_check_branch
          %156 = sbr.rel (%p154) target = $region20
        $region19: #{tpu_custom_call.1} parent=11 // pred_region
          _
        $region20: #{tpu_custom_call.1} parent=11 // pred_fallthru
          _
      $region12: #{tpu_custom_call.1} parent=5 // pred_fallthru
        _
      %p157 = scmp.lt.s32.totalorder %s16, 2
      // Predicated region
      $region21: #{tpu_custom_call.1} parent=5 // pred_check
        %p158 = pneg %p157
      $region22: #{tpu_custom_call.1} parent=5 // pred_check_branch
        %160 = sbr.rel (%p158) target = $region24
      $region23: #{tpu_custom_call.1} parent=5 // pred_region
        // Predicated region
        $region25: #{tpu_custom_call.1} parent=23 // pred_check
          %p161 = pneg %p50
        $region26: #{tpu_custom_call.1} parent=23 // pred_check_branch
          %163 = sbr.rel (%p161) target = $region28
        $region27: #{tpu_custom_call.1} parent=23 // pred_region
          %s164 = sand.u32 %s40, 1
          %s165 = scalar_lea.sflag [#allocation3], %s164
          %s166 = sand.u32 %s40, 1
          %s167 = smul.addr %s166, 64
          %s168 = scalar_lea.vmem [#allocation2], %s167
          %s169 = smul.u32 2, %s24
          %s171 = ssub.s32 1024, 1024
          %172 = vsyncadd %s165, %s171
          %s173 = smul.addr %s23, 8
          %s174 = sadd.s32 %s169, %s173
          %s175 = smul.addr %s174, 128
          %s176 = scalar_lea.hbm %s0, %s175
          %s177 = sshll.u32 %s168, 4
          %s178 = int_to_ptr.vmem [resolvable:$true] %s177
          %183 = dma.hbm_to_vmem [thread:$0]  %s176, 1024, %s178, %s165, 128, 128, 8
        $region28: #{tpu_custom_call.1} parent=23 // pred_fallthru
          _
      $region24: #{tpu_custom_call.1} parent=5 // pred_fallthru
        _
      %p184 = scmp.le.s32.totalorder 1, %s16
      %p185 = scmp.lt.s32.totalorder %s16, 3
      %p186 = pnand %p184, %p185
      %p187 = pneg %p186
      // Predicated region
      $region29: #{tpu_custom_call.1} parent=5 // pred_check
        _
      $region30: #{tpu_custom_call.1} parent=5 // pred_check_branch
        %189 = sbr.rel (%p186) target = $region32
      $region31: #{tpu_custom_call.1} parent=5 // pred_region
        %s190 = ssub.s32 %s16, 1
        %s191 = sand.u32 %s43, 1
        %s192 = scalar_lea.sflag [#allocation3], %s191
        %s193 = sand.u32 %s43, 1
        %s194 = smul.addr %s193, 64
        %s195 = scalar_lea.vmem [#allocation2], %s194
        // Predicated region
        $region33: #{tpu_custom_call.1} parent=31 // pred_check
          %p196 = pneg %p56
        $region34: #{tpu_custom_call.1} parent=31 // pred_check_branch
          %198 = sbr.rel (%p196) target = $region36
        $region35: #{tpu_custom_call.1} parent=31 // pred_region
          %199 = dma.done %s192, 1024
        $region36: #{tpu_custom_call.1} parent=31 // pred_fallthru
          _
        // Predicated region
        $region37: #{tpu_custom_call.1} parent=31 // pred_check
          %p200 = pneg %p77
        $region38: #{tpu_custom_call.1} parent=31 // pred_check_branch
          %202 = sbr.rel (%p200) target = $region40
        $region39: #{tpu_custom_call.1} parent=31 // pred_region
          %203 = dma.done [#allocation6], 2048
        $region40: #{tpu_custom_call.1} parent=31 // pred_fallthru
          _
        %s204 = sand.u32 %s43, 1
        %s205 = scalar_lea.sflag [#allocation3], %s204
        %s206 = sand.u32 %s43, 1
        %s207 = smul.addr %s206, 64
        %s208 = scalar_lea.vmem [#allocation2], %s207
        %p209 = pneg %p56
        %p210 = pneg %p53
        %p211 = pneg %p77
        %p212 = pneg %p74
        %p213 = pneg %p98
        %p214 = pneg %p95
        %p215 = pneg %p126
        %p216 = pneg %p123
        %s217 = sand.u32 %s113, 1
        %s218 = scalar_lea.sflag [#allocation4], %s217
        %s219 = sand.u32 %s113, 1
        %s220 = smul.addr %s219, 16
        %s221 = scalar_lea.vmem [#allocation7], %s220
        %s222 = smul.u32 2, %s26
        %s223 = smul.u32 2, %s26
        %v224 = vld [vmem:[%s2] sm:$0x1]
        %v226 = vlaneseq
        %v227 = vshrl.u32 %v226, 7
        %v228 = vsub.s32 0, %v227
        %v229 = vrot.slane %v224, %v228
        %v231 = vld [vmem:[%s195] sm:$0xff]
        %v232 = vld [vmem:[%s195 + $0x8] sm:$0xff]
        %v233 = vxor.u32 %v231, 2147483648
        %v234 = vxor.u32 %v232, 2147483648
        %v235 = vmul.f32 %v233, 1.442695
        %v236 = vpow.pop %v235
        %v237 = vmul.f32 %v234, 1.442695
        %v238 = vpow.pop %v237
        %v239 = vadd.f32 %v236, 1.0
        %v240 = vadd.f32 %v238, 1.0
        %v241 = vrcp.pop %v239
        %v242 = vmul.f32 1.0, %v241
        %v243 = vrcp.pop %v240
        %v244 = vmul.f32 1.0, %v243
        %v245 = vmul.f32 %v231, %v242
        %v246 = vmul.f32 %v232, %v244
        %v247 = vld [vmem:[#allocation5] sm:$0xff]
        %v248 = vld [vmem:[#allocation5 + $0x8] sm:$0xff]
        %v249 = vld [vmem:[#allocation5 + $0x10] sm:$0xff]
        %v250 = vld [vmem:[#allocation5 + $0x18] sm:$0xff]
        %vm251 = vcmask 261120
        %v253 = vsel %vm251, %v245, 0
        %v256 = vsel %vm251, %v246, 0
        %258 = vmatprep.subr.mxu0 0.0
        %259 = vmatpush1.msra.mxu0 0.0
        %260 = vmatprep.subr.mxu0 0.0
        %261 = vmatpush1.msra.mxu0 0.0
        %262 = vmatprep.subr.mxu0 0.0
        %263 = vmatpush1.msra.mxu0 0.0
        %264 = vmatprep.subr.mxu0 0.0
        %265 = vmatpush1.msra.mxu0 0.0
        %266 = vmatprep.subr.mxu0 0.0
        %267 = vmatpush1.msra.mxu0 0.0
        %268 = vmatprep.subr.mxu0 0.0
        %269 = vmatpush1.msra.mxu0 0.0
        %270 = vmatprep.subr.mxu0 0.0
        %271 = vmatpush1.msra.mxu0 0.0
        %272 = vmatprep.subr.mxu0 0.0
        %273 = vmatpush1.msra.mxu0 0.0
        %274 = vmatprep.subr.mxu0 0.0
        %275 = vmatpush1.msra.mxu0 0.0
        %276 = vmatprep.subr.mxu0 0.0
        %277 = vmatpush1.msra.mxu0 0.0
        %278 = vmatprep.subr.mxu0 0.0
        %279 = vmatpush1.msra.mxu0 0.0
        %280 = vmatprep.subr.mxu0 0.0
        %281 = vmatpush1.msra.mxu0 0.0
        %282 = vmatprep.subr.mxu0 0.0
        %283 = vmatpush1.msra.mxu0 %v250
        %284 = vmatprep.subr.mxu0 0.0
        %285 = vmatpush1.msra.mxu0 %v249
        %286 = vmatprep.subr.mxu0 0.0
        %287 = vmatpush1.msra.mxu0 %v248
        %288 = vmatprep.subr.mxu0 0.0
        %289 = vmatpush1.msra.mxu0 %v247
        %290 = vmatprep.subr.mxu0 0.0
        %291 = vmatpush2.msra.mxu0 0.0
        %292 = vmatprep.subr.mxu0 0.0
        %293 = vmatpush2.msra.mxu0 0.0
        %294 = vmatprep.subr.mxu0 0.0
        %295 = vmatpush2.msra.mxu0 0.0
        %296 = vmatprep.subr.mxu0 0.0
        %297 = vmatpush2.msra.mxu0 0.0
        %298 = vmatprep.subr.mxu0 0.0
        %299 = vmatpush2.msra.mxu0 0.0
        %300 = vmatprep.subr.mxu0 0.0
        %301 = vmatpush2.msra.mxu0 0.0
        %302 = vmatprep.subr.mxu0 0.0
        %303 = vmatpush2.msra.mxu0 0.0
        %304 = vmatprep.subr.mxu0 0.0
        %305 = vmatpush2.msra.mxu0 0.0
        %306 = vmatprep.subr.mxu0 0.0
        %307 = vmatpush2.msra.mxu0 0.0
        %308 = vmatprep.subr.mxu0 0.0
        %309 = vmatpush2.msra.mxu0 0.0
        %310 = vmatprep.subr.mxu0 0.0
        %311 = vmatpush2.msra.mxu0 0.0
        %312 = vmatprep.subr.mxu0 0.0
        %313 = vmatpush2.msra.mxu0 0.0
        %314 = vmatprep.subr.mxu0 0.0
        %315 = vmatpush2.msra.mxu0 0.0
        %316 = vmatprep.subr.mxu0 0.0
        %317 = vmatpush2.msra.mxu0 0.0
        %318 = vmatprep.subr.mxu0 0.0
        %319 = vmatpush2.msra.mxu0 0.0
        %320 = vmatprep.subr.mxu0 0.0
        %321 = vmatpush2.msra.mxu0 0.0
        %322 = vmatprep.mubr.f32.mxu0 0.0
        %323 = vmatmul.mubr.f32.gmra.mxu0 %v253
        %v324 = vpop.f32.mrf.mxu0
        %v325 = vadd.f32 0.0, %v324
        %v326 = vpop.f32.mrf.mxu0
        %327 = vmatprep.mubr.f32.mxu0 0.0
        %328 = vmatmul.mubr.f32.gmra.mxu0 %v256
        %v329 = vpop.f32.mrf.mxu0
        %v330 = vadd.f32 0.0, %v329
        %v331 = vpop.f32.mrf.mxu0
        %332 = vdwg.mxu0
        %v333 = vadd.f32 %v229, %v325
        %v334 = vadd.f32 %v229, %v330
        %s335 = scalar_lea.vmem %s195, 16 [#allocation2]
        %v336 = vld [vmem:[%s335] sm:$0xff]
        %v337 = vld [vmem:[%s335 + $0x8] sm:$0xff]
        %v338 = vxor.u32 %v336, 2147483648
        %v339 = vxor.u32 %v337, 2147483648
        %v340 = vmul.f32 %v338, 1.442695
        %v341 = vpow.pop %v340
        %v342 = vmul.f32 %v339, 1.442695
        %v343 = vpow.pop %v342
        %v344 = vadd.f32 %v341, 1.0
        %v345 = vadd.f32 %v343, 1.0
        %v346 = vrcp.pop %v344
        %v347 = vmul.f32 1.0, %v346
        %v348 = vrcp.pop %v345
        %v349 = vmul.f32 1.0, %v348
        %v350 = vmul.f32 %v336, %v347
        %v351 = vmul.f32 %v337, %v349
        %s352 = scalar_lea.vmem [#allocation5], 32
        %v353 = vld [vmem:[%s352] sm:$0xff]
        %v354 = vld [vmem:[%s352 + $0x8] sm:$0xff]
        %v355 = vld [vmem:[%s352 + $0x10] sm:$0xff]
        %v356 = vld [vmem:[%s352 + $0x18] sm:$0xff]
        %v358 = vsel %vm251, %v350, 0
        %v361 = vsel %vm251, %v351, 0
        %363 = vmatprep.subr.mxu0 0.0
        %364 = vmatpush1.msra.mxu0 0.0
        %365 = vmatprep.subr.mxu0 0.0
        %366 = vmatpush1.msra.mxu0 0.0
        %367 = vmatprep.subr.mxu0 0.0
        %368 = vmatpush1.msra.mxu0 0.0
        %369 = vmatprep.subr.mxu0 0.0
        %370 = vmatpush1.msra.mxu0 0.0
        %371 = vmatprep.subr.mxu0 0.0
        %372 = vmatpush1.msra.mxu0 0.0
        %373 = vmatprep.subr.mxu0 0.0
        %374 = vmatpush1.msra.mxu0 0.0
        %375 = vmatprep.subr.mxu0 0.0
        %376 = vmatpush1.msra.mxu0 0.0
        %377 = vmatprep.subr.mxu0 0.0
        %378 = vmatpush1.msra.mxu0 0.0
        %379 = vmatprep.subr.mxu0 0.0
        %380 = vmatpush1.msra.mxu0 0.0
        %381 = vmatprep.subr.mxu0 0.0
        %382 = vmatpush1.msra.mxu0 0.0
        %383 = vmatprep.subr.mxu0 0.0
        %384 = vmatpush1.msra.mxu0 0.0
        %385 = vmatprep.subr.mxu0 0.0
        %386 = vmatpush1.msra.mxu0 0.0
        %387 = vmatprep.subr.mxu0 0.0
        %388 = vmatpush1.msra.mxu0 %v356
        %389 = vmatprep.subr.mxu0 0.0
        %390 = vmatpush1.msra.mxu0 %v355
        %391 = vmatprep.subr.mxu0 0.0
        %392 = vmatpush1.msra.mxu0 %v354
        %393 = vmatprep.subr.mxu0 0.0
        %394 = vmatpush1.msra.mxu0 %v353
        %395 = vmatprep.subr.mxu0 0.0
        %396 = vmatpush2.msra.mxu0 0.0
        %397 = vmatprep.subr.mxu0 0.0
        %398 = vmatpush2.msra.mxu0 0.0
        %399 = vmatprep.subr.mxu0 0.0
        %400 = vmatpush2.msra.mxu0 0.0
        %401 = vmatprep.subr.mxu0 0.0
        %402 = vmatpush2.msra.mxu0 0.0
        %403 = vmatprep.subr.mxu0 0.0
        %404 = vmatpush2.msra.mxu0 0.0
        %405 = vmatprep.subr.mxu0 0.0
        %406 = vmatpush2.msra.mxu0 0.0
        %407 = vmatprep.subr.mxu0 0.0
        %408 = vmatpush2.msra.mxu0 0.0
        %409 = vmatprep.subr.mxu0 0.0
        %410 = vmatpush2.msra.mxu0 0.0
        %411 = vmatprep.subr.mxu0 0.0
        %412 = vmatpush2.msra.mxu0 0.0
        %413 = vmatprep.subr.mxu0 0.0
        %414 = vmatpush2.msra.mxu0 0.0
        %415 = vmatprep.subr.mxu0 0.0
        %416 = vmatpush2.msra.mxu0 0.0
        %417 = vmatprep.subr.mxu0 0.0
        %418 = vmatpush2.msra.mxu0 0.0
        %419 = vmatprep.subr.mxu0 0.0
        %420 = vmatpush2.msra.mxu0 0.0
        %421 = vmatprep.subr.mxu0 0.0
        %422 = vmatpush2.msra.mxu0 0.0
        %423 = vmatprep.subr.mxu0 0.0
        %424 = vmatpush2.msra.mxu0 0.0
        %425 = vmatprep.subr.mxu0 0.0
        %426 = vmatpush2.msra.mxu0 0.0
        %427 = vmatprep.mubr.f32.mxu0 0.0
        %428 = vmatmul.mubr.f32.gmra.mxu0 %v358
        %v429 = vpop.f32.mrf.mxu0
        %v430 = vadd.f32 0.0, %v429
        %v431 = vpop.f32.mrf.mxu0
        %432 = vmatprep.mubr.f32.mxu0 0.0
        %433 = vmatmul.mubr.f32.gmra.mxu0 %v361
        %v434 = vpop.f32.mrf.mxu0
        %v435 = vadd.f32 0.0, %v434
        %v436 = vpop.f32.mrf.mxu0
        %437 = vdwg.mxu0
        %v438 = vadd.f32 %v333, %v430
        %v439 = vadd.f32 %v334, %v435
        %s440 = scalar_lea.vmem %s195, 32 [#allocation2]
        %v441 = vld [vmem:[%s440] sm:$0xff]
        %v442 = vld [vmem:[%s440 + $0x8] sm:$0xff]
        %v443 = vxor.u32 %v441, 2147483648
        %v444 = vxor.u32 %v442, 2147483648
        %v445 = vmul.f32 %v443, 1.442695
        %v446 = vpow.pop %v445
        %v447 = vmul.f32 %v444, 1.442695
        %v448 = vpow.pop %v447
        %v449 = vadd.f32 %v446, 1.0
        %v450 = vadd.f32 %v448, 1.0
        %v451 = vrcp.pop %v449
        %v452 = vmul.f32 1.0, %v451
        %v453 = vrcp.pop %v450
        %v454 = vmul.f32 1.0, %v453
        %v455 = vmul.f32 %v441, %v452
        %v456 = vmul.f32 %v442, %v454
        %s457 = scalar_lea.vmem [#allocation5], 64
        %v458 = vld [vmem:[%s457] sm:$0xff]
        %v459 = vld [vmem:[%s457 + $0x8] sm:$0xff]
        %v460 = vld [vmem:[%s457 + $0x10] sm:$0xff]
        %v461 = vld [vmem:[%s457 + $0x18] sm:$0xff]
        %v463 = vsel %vm251, %v455, 0
        %v466 = vsel %vm251, %v456, 0
        %468 = vmatprep.subr.mxu0 0.0
        %469 = vmatpush1.msra.mxu0 0.0
        %470 = vmatprep.subr.mxu0 0.0
        %471 = vmatpush1.msra.mxu0 0.0
        %472 = vmatprep.subr.mxu0 0.0
        %473 = vmatpush1.msra.mxu0 0.0
        %474 = vmatprep.subr.mxu0 0.0
        %475 = vmatpush1.msra.mxu0 0.0
        %476 = vmatprep.subr.mxu0 0.0
        %477 = vmatpush1.msra.mxu0 0.0
        %478 = vmatprep.subr.mxu0 0.0
        %479 = vmatpush1.msra.mxu0 0.0
        %480 = vmatprep.subr.mxu0 0.0
        %481 = vmatpush1.msra.mxu0 0.0
        %482 = vmatprep.subr.mxu0 0.0
        %483 = vmatpush1.msra.mxu0 0.0
        %484 = vmatprep.subr.mxu0 0.0
        %485 = vmatpush1.msra.mxu0 0.0
        %486 = vmatprep.subr.mxu0 0.0
        %487 = vmatpush1.msra.mxu0 0.0
        %488 = vmatprep.subr.mxu0 0.0
        %489 = vmatpush1.msra.mxu0 0.0
        %490 = vmatprep.subr.mxu0 0.0
        %491 = vmatpush1.msra.mxu0 0.0
        %492 = vmatprep.subr.mxu0 0.0
        %493 = vmatpush1.msra.mxu0 %v461
        %494 = vmatprep.subr.mxu0 0.0
        %495 = vmatpush1.msra.mxu0 %v460
        %496 = vmatprep.subr.mxu0 0.0
        %497 = vmatpush1.msra.mxu0 %v459
        %498 = vmatprep.subr.mxu0 0.0
        %499 = vmatpush1.msra.mxu0 %v458
        %500 = vmatprep.subr.mxu0 0.0
        %501 = vmatpush2.msra.mxu0 0.0
        %502 = vmatprep.subr.mxu0 0.0
        %503 = vmatpush2.msra.mxu0 0.0
        %504 = vmatprep.subr.mxu0 0.0
        %505 = vmatpush2.msra.mxu0 0.0
        %506 = vmatprep.subr.mxu0 0.0
        %507 = vmatpush2.msra.mxu0 0.0
        %508 = vmatprep.subr.mxu0 0.0
        %509 = vmatpush2.msra.mxu0 0.0
        %510 = vmatprep.subr.mxu0 0.0
        %511 = vmatpush2.msra.mxu0 0.0
        %512 = vmatprep.subr.mxu0 0.0
        %513 = vmatpush2.msra.mxu0 0.0
        %514 = vmatprep.subr.mxu0 0.0
        %515 = vmatpush2.msra.mxu0 0.0
        %516 = vmatprep.subr.mxu0 0.0
        %517 = vmatpush2.msra.mxu0 0.0
        %518 = vmatprep.subr.mxu0 0.0
        %519 = vmatpush2.msra.mxu0 0.0
        %520 = vmatprep.subr.mxu0 0.0
        %521 = vmatpush2.msra.mxu0 0.0
        %522 = vmatprep.subr.mxu0 0.0
        %523 = vmatpush2.msra.mxu0 0.0
        %524 = vmatprep.subr.mxu0 0.0
        %525 = vmatpush2.msra.mxu0 0.0
        %526 = vmatprep.subr.mxu0 0.0
        %527 = vmatpush2.msra.mxu0 0.0
        %528 = vmatprep.subr.mxu0 0.0
        %529 = vmatpush2.msra.mxu0 0.0
        %530 = vmatprep.subr.mxu0 0.0
        %531 = vmatpush2.msra.mxu0 0.0
        %532 = vmatprep.mubr.f32.mxu0 0.0
        %533 = vmatmul.mubr.f32.gmra.mxu0 %v463
        %v534 = vpop.f32.mrf.mxu0
        %v535 = vadd.f32 0.0, %v534
        %v536 = vpop.f32.mrf.mxu0
        %537 = vmatprep.mubr.f32.mxu0 0.0
        %538 = vmatmul.mubr.f32.gmra.mxu0 %v466
        %v539 = vpop.f32.mrf.mxu0
        %v540 = vadd.f32 0.0, %v539
        %v541 = vpop.f32.mrf.mxu0
        %542 = vdwg.mxu0
        %v543 = vadd.f32 %v438, %v535
        %v544 = vadd.f32 %v439, %v540
        %s545 = scalar_lea.vmem %s195, 48 [#allocation2]
        %v546 = vld [vmem:[%s545] sm:$0xff]
        %v547 = vld [vmem:[%s545 + $0x8] sm:$0xff]
        %v548 = vxor.u32 %v546, 2147483648
        %v549 = vxor.u32 %v547, 2147483648
        %v550 = vmul.f32 %v548, 1.442695
        %v551 = vpow.pop %v550
        %v552 = vmul.f32 %v549, 1.442695
        %v553 = vpow.pop %v552
        %v554 = vadd.f32 %v551, 1.0
        %v555 = vadd.f32 %v553, 1.0
        %v556 = vrcp.pop %v554
        %v557 = vmul.f32 1.0, %v556
        %v558 = vrcp.pop %v555
        %v559 = vmul.f32 1.0, %v558
        %v560 = vmul.f32 %v546, %v557
        %v561 = vmul.f32 %v547, %v559
        %s562 = scalar_lea.vmem [#allocation5], 96
        %v563 = vld [vmem:[%s562] sm:$0xff]
        %v564 = vld [vmem:[%s562 + $0x8] sm:$0xff]
        %v565 = vld [vmem:[%s562 + $0x10] sm:$0xff]
        %v566 = vld [vmem:[%s562 + $0x18] sm:$0xff]
        %v568 = vsel %vm251, %v560, 0
        %v571 = vsel %vm251, %v561, 0
        %573 = vmatprep.subr.mxu0 0.0
        %574 = vmatpush1.msra.mxu0 0.0
        %575 = vmatprep.subr.mxu0 0.0
        %576 = vmatpush1.msra.mxu0 0.0
        %577 = vmatprep.subr.mxu0 0.0
        %578 = vmatpush1.msra.mxu0 0.0
        %579 = vmatprep.subr.mxu0 0.0
        %580 = vmatpush1.msra.mxu0 0.0
        %581 = vmatprep.subr.mxu0 0.0
        %582 = vmatpush1.msra.mxu0 0.0
        %583 = vmatprep.subr.mxu0 0.0
        %584 = vmatpush1.msra.mxu0 0.0
        %585 = vmatprep.subr.mxu0 0.0
        %586 = vmatpush1.msra.mxu0 0.0
        %587 = vmatprep.subr.mxu0 0.0
        %588 = vmatpush1.msra.mxu0 0.0
        %589 = vmatprep.subr.mxu0 0.0
        %590 = vmatpush1.msra.mxu0 0.0
        %591 = vmatprep.subr.mxu0 0.0
        %592 = vmatpush1.msra.mxu0 0.0
        %593 = vmatprep.subr.mxu0 0.0
        %594 = vmatpush1.msra.mxu0 0.0
        %595 = vmatprep.subr.mxu0 0.0
        %596 = vmatpush1.msra.mxu0 0.0
        %597 = vmatprep.subr.mxu0 0.0
        %598 = vmatpush1.msra.mxu0 %v566
        %599 = vmatprep.subr.mxu0 0.0
        %600 = vmatpush1.msra.mxu0 %v565
        %601 = vmatprep.subr.mxu0 0.0
        %602 = vmatpush1.msra.mxu0 %v564
        %603 = vmatprep.subr.mxu0 0.0
        %604 = vmatpush1.msra.mxu0 %v563
        %605 = vmatprep.subr.mxu0 0.0
        %606 = vmatpush2.msra.mxu0 0.0
        %607 = vmatprep.subr.mxu0 0.0
        %608 = vmatpush2.msra.mxu0 0.0
        %609 = vmatprep.subr.mxu0 0.0
        %610 = vmatpush2.msra.mxu0 0.0
        %611 = vmatprep.subr.mxu0 0.0
        %612 = vmatpush2.msra.mxu0 0.0
        %613 = vmatprep.subr.mxu0 0.0
        %614 = vmatpush2.msra.mxu0 0.0
        %615 = vmatprep.subr.mxu0 0.0
        %616 = vmatpush2.msra.mxu0 0.0
        %617 = vmatprep.subr.mxu0 0.0
        %618 = vmatpush2.msra.mxu0 0.0
        %619 = vmatprep.subr.mxu0 0.0
        %620 = vmatpush2.msra.mxu0 0.0
        %621 = vmatprep.subr.mxu0 0.0
        %622 = vmatpush2.msra.mxu0 0.0
        %623 = vmatprep.subr.mxu0 0.0
        %624 = vmatpush2.msra.mxu0 0.0
        %625 = vmatprep.subr.mxu0 0.0
        %626 = vmatpush2.msra.mxu0 0.0
        %627 = vmatprep.subr.mxu0 0.0
        %628 = vmatpush2.msra.mxu0 0.0
        %629 = vmatprep.subr.mxu0 0.0
        %630 = vmatpush2.msra.mxu0 0.0
        %631 = vmatprep.subr.mxu0 0.0
        %632 = vmatpush2.msra.mxu0 0.0
        %633 = vmatprep.subr.mxu0 0.0
        %634 = vmatpush2.msra.mxu0 0.0
        %635 = vmatprep.subr.mxu0 0.0
        %636 = vmatpush2.msra.mxu0 0.0
        %637 = vmatprep.mubr.f32.mxu0 0.0
        %638 = vmatmul.mubr.f32.gmra.mxu0 %v568
        %v639 = vpop.f32.mrf.mxu0
        %v640 = vadd.f32 0.0, %v639
        %v641 = vpop.f32.mrf.mxu0
        %642 = vmatprep.mubr.f32.mxu0 0.0
        %643 = vmatmul.mubr.f32.gmra.mxu0 %v571
        %v644 = vpop.f32.mrf.mxu0
        %v645 = vadd.f32 0.0, %v644
        %v646 = vpop.f32.mrf.mxu0
        %647 = vdwg.mxu0
        %v648 = vadd.f32 %v543, %v640
        %v649 = vadd.f32 %v544, %v645
        %650 = vst [vmem:[%s221] sm:$0xff] %v648
        %651 = vst [vmem:[%s221 + $0x8] sm:$0xff] %v649
        %s652 = sand.u32 %s113, 1
        %s653 = scalar_lea.sflag [#allocation4], %s652
        %s654 = sand.u32 %s113, 1
        %s655 = smul.addr %s654, 16
        %s656 = scalar_lea.vmem [#allocation7], %s655
        // Predicated region
        $region41: #{tpu_custom_call.1} parent=31 // pred_check
          %p657 = pneg %p123
        $region42: #{tpu_custom_call.1} parent=31 // pred_check_branch
          %659 = sbr.rel (%p657) target = $region44
        $region43: #{tpu_custom_call.1} parent=31 // pred_region
          %s660 = smul.u32 2, %s26
          %s662 = ssub.s32 256, 256
          %663 = vsyncadd %s653, %s662
          %s664 = smul.addr %s25, 2
          %s665 = sadd.s32 %s660, %s664
          %s666 = smul.addr %s665, 128
          %s667 = scalar_lea.hbm %s3, %s666
          %s668 = sshll.u32 %s656, 4
          %s669 = int_to_ptr.vmem [resolvable:$true] %s668
          %674 = dma.vmem_to_hbm [thread:$0]  %s669, 256, %s667, %s653, 128, 128, 8
        $region44: #{tpu_custom_call.1} parent=31 // pred_fallthru
          _
      $region32: #{tpu_custom_call.1} parent=5 // pred_fallthru
        _
      %p675 = scmp.le.s32.totalorder 2, %s16
      // Predicated region
      $region45: #{tpu_custom_call.1} parent=5 // pred_check
        %p676 = pneg %p675
      $region46: #{tpu_custom_call.1} parent=5 // pred_check_branch
        %678 = sbr.rel (%p676) target = $region48
      $region47: #{tpu_custom_call.1} parent=5 // pred_region
        %s679 = ssub.s32 %s16, 2
        // Predicated region
        $region49: #{tpu_custom_call.1} parent=47 // pred_check
          %p680 = pneg %p129
        $region50: #{tpu_custom_call.1} parent=47 // pred_check_branch
          %682 = sbr.rel (%p680) target = $region52
        $region51: #{tpu_custom_call.1} parent=47 // pred_region
          %s683 = sand.u32 %s114, 1
          %s684 = scalar_lea.sflag [#allocation4], %s683
          %s685 = sand.u32 %s114, 1
          %s686 = smul.addr %s685, 16
          %s687 = scalar_lea.vmem [#allocation7], %s686
          %688 = dma.done %s684, 256
        $region52: #{tpu_custom_call.1} parent=47 // pred_fallthru
          _
      $region48: #{tpu_custom_call.1} parent=5 // pred_fallthru
        _
    $region6: #{tpu_custom_call.1} parent=1 // loop_footer
      %s20 = sadd.s32 1, %s16
    $region7: #{tpu_custom_call.1} parent=1 // loop_footer_branch
      %15 = sbr.rel target = $region3
    $region8: #{tpu_custom_call.1} parent=1 // loop_exit
      _
    %689 = vsyncpa [#allocation3], 1
    %s690 = scalar_lea.sflag [#allocation3], 1
    %691 = vsyncpa %s690, 1
    %692 = vsyncpa [#allocation6], 1
    %693 = vsyncpa [#allocation4], 1
    %s694 = scalar_lea.sflag [#allocation4], 1
    %695 = vsyncpa %s694, 1

</llo_original>
